<compile_context>
chip_gen: v7x
topology: tpu7x:2x2x1
jax: 0.10.0
libtpu: 0.0.40
codegen_flags: <defaults>
</compile_context>

<pallas_src>
import jax
import jax.numpy as jnp
from jax.experimental import pallas as pl
from jax.experimental.pallas import tpu as pltpu


_LANE = 128   # vreg lane width
_SUB = 8      # vreg sublane count
_MAX_TM = 512  # rows per block: 512x128 f32 = 256 KiB/block, ~1 MiB double-buffered


def _identity_copy_kernel(x_ref, o_ref):
    # Pure pass-through: one full-tile load + one full-tile (lane-dense) store.
    o_ref[...] = x_ref[...]


def identity_pallas(x):
    """Pallas implementation of nn.Identity().forward(x). Returns x unchanged."""
    orig_shape = x.shape
    n = x.size
    if n == 0:
        return x

    flat = x.reshape(-1)

    # Lay the data out lane-dense: last dim = 128 lanes, rows on the sublane axis.
    rows = pl.cdiv(n, _LANE)
    # Row tile: at most _MAX_TM rows, padded up to a sublane multiple.
    tm = min(_MAX_TM, pl.cdiv(rows, _SUB) * _SUB)
    rows_pad = pl.cdiv(rows, tm) * tm
    total_pad = rows_pad * _LANE
    if total_pad != n:
        flat = jnp.pad(flat, (0, total_pad - n))
    x2d = flat.reshape(rows_pad, _LANE)

    grid = (rows_pad // tm,)

    out2d = pl.pallas_call(
        _identity_copy_kernel,
        out_shape=jax.ShapeDtypeStruct((rows_pad, _LANE), x2d.dtype),
        grid=grid,
        in_specs=[pl.BlockSpec((tm, _LANE), lambda i: (i, 0))],
        out_specs=pl.BlockSpec((tm, _LANE), lambda i: (i, 0)),
        compiler_params=pltpu.CompilerParams(
            dimension_semantics=("parallel",),
        ),
    )(x2d)

    return out2d.reshape(-1)[:n].reshape(orig_shape)


if __name__ == "__main__":
    key = jax.random.PRNGKey(0)
    k1, k2 = jax.random.split(key)

    fwd = jax.jit(identity_pallas)

    # Small shape consistent with the module's usage (any tensor passes through).
    x_small = jax.random.normal(k1, (2, 4, 16, 16), jnp.float32)
    y_small = fwd(x_small)
    jax.block_until_ready(y_small)
    assert y_small.shape == x_small.shape and y_small.dtype == x_small.dtype
    assert bool(jnp.all(y_small == x_small)), "identity mismatch (small)"

    # Larger shape to exercise a multi-block grid (grid > 1, parallel axis).
    x_big = jax.random.normal(k2, (2, 8, 128, 128), jnp.float32)
    y_big = fwd(x_big)
    jax.block_until_ready(y_big)
    assert y_big.shape == x_big.shape and y_big.dtype == x_big.dtype
    assert bool(jnp.all(y_big == x_big)), "identity mismatch (big)"

    print("KERNEL_OK")
</pallas_src>

<mosaic_0001>
module attributes {stable_mosaic.version = 11 : i64} {
  func.func @_identity_copy_kernel(%arg0: i32, %arg1: memref<16x128xf32, #tpu.memory_space<vmem>>, %arg2: memref<16x128xf32, #tpu.memory_space<vmem>>) attributes {dimension_semantics = [#tpu.dimension_semantics<parallel>], iteration_bounds = array<i64: 1>, scalar_prefetch = 0 : i64, scratch_operands = 0 : i64, tpu.core_type = #tpu.core_type<tc>, window_params = [{transform_indices = @transform_0, window_bounds = array<i64: 16, 128>}, {transform_indices = @transform_1, window_bounds = array<i64: 16, 128>}]} {
    %c0 = arith.constant 0 : index
    %c0_0 = arith.constant 0 : index
    %0 = vector.load %arg1[%c0, %c0_0] : memref<16x128xf32, #tpu.memory_space<vmem>>, vector<16x128xf32>
    %c0_1 = arith.constant 0 : index
    %c0_2 = arith.constant 0 : index
    %1 = vector.load %arg2[%c0_1, %c0_2] : memref<16x128xf32, #tpu.memory_space<vmem>>, vector<16x128xf32>
    tpu.vector_store %arg2[%c0_1, %c0_2], %0 {strides = array<i32>} : memref<16x128xf32, #tpu.memory_space<vmem>>, vector<16x128xf32>,
    return
  }
  func.func @transform_0(%arg0: i32) -> (i32, i32) {
    %c0_i32 = arith.constant 0 : i32
    %c0_i32_0 = arith.constant 0 : i32
    return %arg0, %c0_i32 : i32, i32
  }
  func.func @transform_1(%arg0: i32) -> (i32, i32) {
    %c0_i32 = arith.constant 0 : i32
    %c0_i32_0 = arith.constant 0 : i32
    return %arg0, %c0_i32 : i32, i32
  }
}

</mosaic_0001>

<llo_original>
// kernel: identity_pallas.1
$region0: #{identity_pallas.1}
  #allocation0 [shape = 'u32[]', space=smem, size = 0x4, offset = 0x4, fixed_abs, tag = 'smem constant byte address 0x4 - core index']
  #allocation1 [shape = 'u32[144,128]{1,0:T(1,128)}', space=vmem, size = 0x12000, scoped, tag = 'internal scratch']
  %s0 = inlined_call_operand.vmem [shape: f32[16,128], index: 0, kind: input, shape index: {}]
  %s1 = inlined_call_operand.vmem [shape: f32[16,128], index: 1, kind: output, shape index: {}]
  %s2 = sld [smem:[#allocation0]]
  $region14: #{identity_pallas.1} parent=0
    _
  %s4 = ssub.s32 1, %s2
  %s5 = scalar_select 0, %s4, %s2
  // Predicated region
  $region2: #{identity_pallas.1} parent=0 // pred_check
    _
  $region3: #{identity_pallas.1} parent=0 // pred_check_branch
    %7 = sbr.rel (0) target = $region5
  $region4: #{identity_pallas.1} parent=0 // pred_region
    _
  $region5: #{identity_pallas.1} parent=0 // pred_fallthru
    _
  %v8 = vld [vmem:[%s0] sm:$0xff]
  %v9 = vld [vmem:[%s0 + $0x8] sm:$0xff]
  %10 = vst [vmem:[%s1] sm:$0xff] %v8
  %11 = vst [vmem:[%s1 + $0x8] sm:$0xff] %v9
  // Predicated region
  $region6: #{identity_pallas.1} parent=0 // pred_check
    _
  $region7: #{identity_pallas.1} parent=0 // pred_check_branch
    %13 = sbr.rel (0) target = $region9
  $region8: #{identity_pallas.1} parent=0 // pred_region
    _
  $region9: #{identity_pallas.1} parent=0 // pred_fallthru
    _
  // Predicated region
  $region10: #{identity_pallas.1} parent=0 // pred_check
    _
  $region11: #{identity_pallas.1} parent=0 // pred_check_branch
    %15 = sbr.rel (0) target = $region13
  $region12: #{identity_pallas.1} parent=0 // pred_region
    _
  $region13: #{identity_pallas.1} parent=0 // pred_fallthru
    _

</llo_original>
